<compile_context>
chip_gen: v7x
topology: tpu7x:2x2x1
jax: 0.10.0
libtpu: 0.0.40
codegen_flags: <defaults>
</compile_context>

<pallas_src>
import numpy as np
import jax
import jax.numpy as jnp
from jax.experimental import pallas as pl
from jax.experimental.pallas import tpu as pltpu


def _specaug_kernel(params_ref, x_ref, o_ref):
    """params_ref: SMEM int32 [B*8] =
         per batch b: [f0_0, f_0, f0_1, f_1, t0_0, t_0, t0_1, t_1] at b*8.
    x_ref/o_ref: VMEM [C, M, T_tile] block (batch dim squeezed)."""
    b = pl.program_id(0)
    t_blk = pl.program_id(1)

    x = x_ref[...]                       # (C, M, Tt)
    M = x.shape[-2]
    Tt = x.shape[-1]
    t_off = t_blk * Tt                   # element offset of this time tile

    # Rank-1 index vectors (cheap: M or Tt elements, not M*T).
    mel_idx = jax.lax.broadcasted_iota(jnp.int32, (M, 1), 0)
    time_idx = jax.lax.broadcasted_iota(jnp.int32, (1, Tt), 1) + t_off

    base = b * 8

    # Two frequency masks -> keep_mel (M, 1)
    keep_mel = jnp.ones((M, 1), dtype=jnp.bool_)
    for j in range(2):
        f0 = params_ref[base + 2 * j]
        f = params_ref[base + 2 * j + 1]
        keep_mel = keep_mel & jnp.logical_not((mel_idx >= f0) & (mel_idx < f0 + f))

    # Two time masks -> keep_time (1, Tt)
    keep_time = jnp.ones((1, Tt), dtype=jnp.bool_)
    for j in range(2):
        t0 = params_ref[base + 4 + 2 * j]
        t = params_ref[base + 4 + 2 * j + 1]
        keep_time = keep_time & jnp.logical_not((time_idx >= t0) & (time_idx < t0 + t))

    # Outer product of the two rank-1 keep vectors (one full-tile multiply),
    # then one multiply per element. No full-tile zero constant.
    keep = keep_mel.astype(x.dtype) * keep_time.astype(x.dtype)   # (M, Tt)
    o_ref[...] = x * keep[None, :, :]


def _choose_time_tile(C, M, T, itemsize, vmem_budget_bytes=8 * 1024 * 1024):
    """Pick the time-tile size.

    Uses the full per-sample block when ~4x block bytes (in+out, each
    double-buffered) fits a conservative budget that is safe even under
    v5e's 16 MiB default scoped VMEM (and leaves headroom on v7x's 64 MiB).
    Otherwise tiles T into the largest 128-lane multiple that divides T.
    """
    block_bytes = C * M * T * itemsize
    if 4 * block_bytes <= vmem_budget_bytes or T % 128 != 0:
        # If T is not a multiple of 128 the only legal lane extent is full T
        # (block lane dim must be a 128-multiple or the full array extent).
        return T
    for k in range(T // 128, 0, -1):
        tile = 128 * k
        if T % tile == 0 and 4 * C * M * tile * itemsize <= vmem_budget_bytes:
            return tile
    return 128


def spec_augment(spec, mask_params, *, training=True, time_tile=None):
    """spec: [B, C, n_mels, time]; mask_params: flat int32 [B*8]."""
    if not training:
        # Eval mode in the reference module is a pure pass-through.
        return spec

    B, C, M, T = spec.shape
    itemsize = jnp.dtype(spec.dtype).itemsize

    if time_tile is None:
        time_tile = _choose_time_tile(C, M, T, itemsize)
    assert T % time_tile == 0, "time_tile must divide the time dimension"
    n_t = T // time_tile

    block = (pl.Squeezed(), C, M, time_tile)
    n_elems = B * C * M * T
    cost = pl.CostEstimate(
        flops=n_elems,                          # one multiply per element
        transcendentals=0,
        bytes_accessed=2 * n_elems * itemsize,  # read + write, memory bound
    )

    return pl.pallas_call(
        _specaug_kernel,
        out_shape=jax.ShapeDtypeStruct(spec.shape, spec.dtype),
        grid_spec=pltpu.PrefetchScalarGridSpec(
            num_scalar_prefetch=1,
            grid=(B, n_t),
            in_specs=[pl.BlockSpec(block, lambda b, t, p: (b, 0, 0, t))],
            out_specs=pl.BlockSpec(block, lambda b, t, p: (b, 0, 0, t)),
        ),
        compiler_params=pltpu.CompilerParams(
            dimension_semantics=("parallel", "parallel")),
        cost_estimate=cost,
    )(mask_params, spec)


def sample_mask_params(batch_size, n_mels, time_steps,
                       freq_mask_param, time_mask_param, seed=0):
    """Replicates the np.random.randint draw semantics of the reference
    forward() (legacy MT19937 RandomState). Returns flat int32 [B*8]:
    per batch b -> [f0_0, f_0, f0_1, f_1, t0_0, t_0, t0_1, t_1]."""
    rng = np.random.RandomState(seed)
    params = np.zeros((batch_size, 8), dtype=np.int32)
    # Frequency masks (same loop order as the reference).
    for i in range(batch_size):
        for j in range(2):
            f = rng.randint(0, freq_mask_param)        # [0, freq_mask_param)
            f0 = rng.randint(0, n_mels - f)            # [0, n_mels - f)
            params[i, 2 * j] = f0
            params[i, 2 * j + 1] = f
    # Time masks.
    for i in range(batch_size):
        for j in range(2):
            t = rng.randint(0, time_mask_param)        # [0, time_mask_param)
            t0 = rng.randint(0, time_steps - t)        # [0, time_steps - t)
            params[i, 4 + 2 * j] = t0
            params[i, 4 + 2 * j + 1] = t
    return jnp.asarray(params.reshape(-1))             # 1-D for dense SMEM


def _reference_numpy(spec_np, params_np):
    """Pure-numpy reference of the masking, for a correctness check.
    params_np: [B, 8]."""
    out = spec_np.copy()
    B = out.shape[0]
    for i in range(B):
        for j in range(2):
            f0, f = int(params_np[i, 2 * j]), int(params_np[i, 2 * j + 1])
            out[i, :, f0:f0 + f, :] = 0
        for j in range(2):
            t0, t = int(params_np[i, 4 + 2 * j]), int(params_np[i, 4 + 2 * j + 1])
            out[i, :, :, t0:t0 + t] = 0
    return out


if __name__ == "__main__":
    # Small shapes consistent with [batch, channels, n_mels, time].
    B, C, M, T = 2, 4, 16, 16
    freq_mask_param, time_mask_param = 8, 8

    key = jax.random.PRNGKey(0)
    spec = jax.random.normal(key, (B, C, M, T), dtype=jnp.float32)

    mask_params = sample_mask_params(B, M, T, freq_mask_param,
                                     time_mask_param, seed=0)

    out = spec_augment(spec, mask_params, training=True)
    out = jax.block_until_ready(out)

    ref = _reference_numpy(np.asarray(spec),
                           np.asarray(mask_params).reshape(B, 8))
    np.testing.assert_allclose(np.asarray(out), ref, rtol=0, atol=0)

    # Eval-mode pass-through check.
    np.testing.assert_allclose(
        np.asarray(spec_augment(spec, mask_params, training=False)),
        np.asarray(spec), rtol=0, atol=0)

    print("KERNEL_OK")
</pallas_src>

<mosaic_0001>
module attributes {stable_mosaic.version = 11 : i64} {
  func.func @_specaug_kernel(%arg0: i32, %arg1: i32, %arg2: memref<16xi32, #tpu.memory_space<smem>>, %arg3: memref<1x4x16x16xf32, #tpu.memory_space<vmem>>, %arg4: memref<1x4x16x16xf32, #tpu.memory_space<vmem>>) attributes {dimension_semantics = [#tpu.dimension_semantics<parallel>, #tpu.dimension_semantics<parallel>], iteration_bounds = array<i64: 2, 1>, scalar_prefetch = 1 : i64, scratch_operands = 0 : i64, tpu.core_type = #tpu.core_type<tc>, window_params = [{transform_indices = @transform_0, window_bounds = array<i64: 1, 4, 16, 16>}, {transform_indices = @transform_1, window_bounds = array<i64: 1, 4, 16, 16>}]} {
    %c0 = arith.constant 0 : index
    %c0_0 = arith.constant 0 : index
    %c0_1 = arith.constant 0 : index
    %c0_2 = arith.constant 0 : index
    %0 = vector.load %arg3[%c0, %c0_0, %c0_1, %c0_2] : memref<1x4x16x16xf32, #tpu.memory_space<vmem>>, vector<1x4x16x16xf32>
    %1 = vector.shape_cast %0 : vector<1x4x16x16xf32> to vector<4x16x16xf32>
    %c16_i32 = arith.constant 16 : i32
    %2 = arith.muli %arg1, %c16_i32 : i32
    %3 = tpu.iota {dimensions = array<i32: 0>} : vector<16x1xi32>
    %4 = tpu.iota {dimensions = array<i32: 1>} : vector<1x16xi32>
    %5 = vector.broadcast %2 : i32 to vector<1x16xi32>
    %6 = arith.addi %4, %5 : vector<1x16xi32>
    %c8_i32 = arith.constant 8 : i32
    %7 = arith.muli %arg0, %c8_i32 : i32
    %true = arith.constant true
    %8 = vector.broadcast %true : i1 to vector<16x1xi1>
    %c0_i32 = arith.constant 0 : i32
    %9 = arith.addi %7, %c0_i32 : i32
    %10 = arith.index_cast %9 : i32 to index
    %11 = memref.load %arg2[%10] : memref<16xi32, #tpu.memory_space<smem>>
    %c0_i32_3 = arith.constant 0 : i32
    %12 = arith.addi %7, %c0_i32_3 : i32
    %c1_i32 = arith.constant 1 : i32
    %13 = arith.addi %12, %c1_i32 : i32
    %14 = arith.index_cast %13 : i32 to index
    %15 = memref.load %arg2[%14] : memref<16xi32, #tpu.memory_space<smem>>
    %16 = vector.broadcast %11 : i32 to vector<16x1xi32>
    %17 = arith.cmpi sge, %3, %16 : vector<16x1xi32>
    %18 = arith.addi %11, %15 : i32
    %19 = vector.broadcast %18 : i32 to vector<16x1xi32>
    %20 = arith.cmpi slt, %3, %19 : vector<16x1xi32>
    %21 = arith.andi %17, %20 : vector<16x1xi1>
    %cst = arith.constant dense<true> : vector<16x1xi1>
    %22 = arith.xori %21, %cst : vector<16x1xi1>
    %23 = arith.andi %8, %22 : vector<16x1xi1>
    %c2_i32 = arith.constant 2 : i32
    %24 = arith.addi %7, %c2_i32 : i32
    %25 = arith.index_cast %24 : i32 to index
    %26 = memref.load %arg2[%25] : memref<16xi32, #tpu.memory_space<smem>>
    %c2_i32_4 = arith.constant 2 : i32
    %27 = arith.addi %7, %c2_i32_4 : i32
    %c1_i32_5 = arith.constant 1 : i32
    %28 = arith.addi %27, %c1_i32_5 : i32
    %29 = arith.index_cast %28 : i32 to index
    %30 = memref.load %arg2[%29] : memref<16xi32, #tpu.memory_space<smem>>
    %31 = vector.broadcast %26 : i32 to vector<16x1xi32>
    %32 = arith.cmpi sge, %3, %31 : vector<16x1xi32>
    %33 = arith.addi %26, %30 : i32
    %34 = vector.broadcast %33 : i32 to vector<16x1xi32>
    %35 = arith.cmpi slt, %3, %34 : vector<16x1xi32>
    %36 = arith.andi %32, %35 : vector<16x1xi1>
    %cst_6 = arith.constant dense<true> : vector<16x1xi1>
    %37 = arith.xori %36, %cst_6 : vector<16x1xi1>
    %38 = arith.andi %23, %37 : vector<16x1xi1>
    %true_7 = arith.constant true
    %39 = vector.broadcast %true_7 : i1 to vector<1x16xi1>
    %c4_i32 = arith.constant 4 : i32
    %40 = arith.addi %7, %c4_i32 : i32
    %c0_i32_8 = arith.constant 0 : i32
    %41 = arith.addi %40, %c0_i32_8 : i32
    %42 = arith.index_cast %41 : i32 to index
    %43 = memref.load %arg2[%42] : memref<16xi32, #tpu.memory_space<smem>>
    %c4_i32_9 = arith.constant 4 : i32
    %44 = arith.addi %7, %c4_i32_9 : i32
    %c0_i32_10 = arith.constant 0 : i32
    %45 = arith.addi %44, %c0_i32_10 : i32
    %c1_i32_11 = arith.constant 1 : i32
    %46 = arith.addi %45, %c1_i32_11 : i32
    %47 = arith.index_cast %46 : i32 to index
    %48 = memref.load %arg2[%47] : memref<16xi32, #tpu.memory_space<smem>>
    %49 = vector.broadcast %43 : i32 to vector<1x16xi32>
    %50 = arith.cmpi sge, %6, %49 : vector<1x16xi32>
    %51 = arith.addi %43, %48 : i32
    %52 = vector.broadcast %51 : i32 to vector<1x16xi32>
    %53 = arith.cmpi slt, %6, %52 : vector<1x16xi32>
    %54 = arith.andi %50, %53 : vector<1x16xi1>
    %cst_12 = arith.constant dense<true> : vector<1x16xi1>
    %55 = arith.xori %54, %cst_12 : vector<1x16xi1>
    %56 = arith.andi %39, %55 : vector<1x16xi1>
    %c4_i32_13 = arith.constant 4 : i32
    %57 = arith.addi %7, %c4_i32_13 : i32
    %c2_i32_14 = arith.constant 2 : i32
    %58 = arith.addi %57, %c2_i32_14 : i32
    %59 = arith.index_cast %58 : i32 to index
    %60 = memref.load %arg2[%59] : memref<16xi32, #tpu.memory_space<smem>>
    %c4_i32_15 = arith.constant 4 : i32
    %61 = arith.addi %7, %c4_i32_15 : i32
    %c2_i32_16 = arith.constant 2 : i32
    %62 = arith.addi %61, %c2_i32_16 : i32
    %c1_i32_17 = arith.constant 1 : i32
    %63 = arith.addi %62, %c1_i32_17 : i32
    %64 = arith.index_cast %63 : i32 to index
    %65 = memref.load %arg2[%64] : memref<16xi32, #tpu.memory_space<smem>>
    %66 = vector.broadcast %60 : i32 to vector<1x16xi32>
    %67 = arith.cmpi sge, %6, %66 : vector<1x16xi32>
    %68 = arith.addi %60, %65 : i32
    %69 = vector.broadcast %68 : i32 to vector<1x16xi32>
    %70 = arith.cmpi slt, %6, %69 : vector<1x16xi32>
    %71 = arith.andi %67, %70 : vector<1x16xi1>
    %cst_18 = arith.constant dense<true> : vector<1x16xi1>
    %72 = arith.xori %71, %cst_18 : vector<1x16xi1>
    %73 = arith.andi %56, %72 : vector<1x16xi1>
    %74 = arith.extui %38 : vector<16x1xi1> to vector<16x1xi32>
    %75 = arith.sitofp %74 : vector<16x1xi32> to vector<16x1xf32>
    %76 = arith.extui %73 : vector<1x16xi1> to vector<1x16xi32>
    %77 = arith.sitofp %76 : vector<1x16xi32> to vector<1x16xf32>
    %78 = vector.broadcast %75 : vector<16x1xf32> to vector<16x16xf32>
    %79 = vector.broadcast %77 : vector<1x16xf32> to vector<16x16xf32>
    %80 = arith.mulf %78, %79 : vector<16x16xf32>
    %81 = vector.shape_cast %80 : vector<16x16xf32> to vector<1x16x16xf32>
    %82 = vector.broadcast %81 : vector<1x16x16xf32> to vector<4x16x16xf32>
    %83 = arith.mulf %1, %82 : vector<4x16x16xf32>
    %c0_19 = arith.constant 0 : index
    %c0_20 = arith.constant 0 : index
    %c0_21 = arith.constant 0 : index
    %c0_22 = arith.constant 0 : index
    %84 = vector.load %arg4[%c0_19, %c0_20, %c0_21, %c0_22] : memref<1x4x16x16xf32, #tpu.memory_space<vmem>>, vector<1x4x16x16xf32>
    %85 = vector.shape_cast %84 : vector<1x4x16x16xf32> to vector<4x16x16xf32>
    %86 = vector.shape_cast %83 : vector<4x16x16xf32> to vector<1x4x16x16xf32>
    tpu.vector_store %arg4[%c0_19, %c0_20, %c0_21, %c0_22], %86 {strides = array<i32>} : memref<1x4x16x16xf32, #tpu.memory_space<vmem>>, vector<1x4x16x16xf32>,
    return
  }
  func.func @transform_0(%arg0: i32, %arg1: i32, %arg2: memref<16xi32, #tpu.memory_space<smem>>) -> (i32, i32, i32, i32) {
    %c0_i32 = arith.constant 0 : i32
    %c0_i32_0 = arith.constant 0 : i32
    %c0_i32_1 = arith.constant 0 : i32
    return %arg0, %c0_i32, %c0_i32_0, %arg1 : i32, i32, i32, i32
  }
  func.func @transform_1(%arg0: i32, %arg1: i32, %arg2: memref<16xi32, #tpu.memory_space<smem>>) -> (i32, i32, i32, i32) {
    %c0_i32 = arith.constant 0 : i32
    %c0_i32_0 = arith.constant 0 : i32
    %c0_i32_1 = arith.constant 0 : i32
    return %arg0, %c0_i32, %c0_i32_0, %arg1 : i32, i32, i32, i32
  }
}

</mosaic_0001>

<llo_original>
// kernel: tpu_custom_call.1
$region0: #{tpu_custom_call.1}
  #allocation0 [shape = 'u32[]', space=smem, size = 0x4, offset = 0x4, fixed_abs, tag = 'smem constant byte address 0x4 - core index']
  #allocation1 [shape = 'u32[144,128]{1,0:T(1,128)}', space=vmem, size = 0x12000, scoped, tag = 'internal scratch']
  #allocation2 [shape = 's32[1]{0}', space=sflag, size = 0x4, scoped, tag = 'scoped memory for tpu_custom_call.1']
  #allocation3 [shape = 'u8[512]{0}', space=smem, size = 0x200, scoped, tag = 'prefetched SMEM operand 0']
  %s0 = inlined_call_operand.hbm [shape: s32[16], index: 0, kind: input, shape index: {}]
  %s1 = inlined_call_operand.hbm [shape: f32[2,4,16,16], index: 1, kind: input, shape index: {}]
  %s2 = inlined_call_operand.hbm [shape: f32[2,4,16,16], index: 2, kind: output, shape index: {}]
  %s3 = sld [smem:[#allocation0]]
  $region41: #{tpu_custom_call.1} parent=0
    _
  %s5 = ssub.s32 1, %s3
  %s6 = scalar_select 0, %s5, %s3
  %8 = dma.hbm_to_smem %s0, 16, [#allocation3], [#allocation2]
  %9 = dma.done [#allocation2], 16
  %10 = sfence
  $region1: #{tpu_custom_call.1} parent=0
    #allocation4 [shape = 'u8[65536]{0}', space=vmem, size = 0x10000, scoped, tag = 'input window, operand 1']
    #allocation5 [shape = 's32[2]{0}', space=sflag, size = 0x8, scoped, tag = 'scoped memory for tpu_custom_call.1']
    #allocation6 [shape = 's32[2]{0}', space=sflag, size = 0x8, scoped, tag = 'scoped memory for tpu_custom_call.1']
    #allocation7 [shape = 'u8[65536]{0}', space=vmem, size = 0x10000, scoped, tag = 'output window, operand 0']
    %11 = vsyncpa [#allocation5], 0
    %s12 = scalar_lea.sflag [#allocation5], 1
    %13 = vsyncpa %s12, 0
    %14 = vsyncpa [#allocation6], 0
    %s15 = scalar_lea.sflag [#allocation6], 1
    %16 = vsyncpa %s15, 0
    loop: start=0, step=1, limit=4
    $region2: #{tpu_custom_call.1} parent=1 // loop_pre_header
      _
    $region3: #{tpu_custom_call.1} parent=1 // loop_header
      %s18 = sphi 0, %s22
      %p19 = scmp.ge.s32.totalorder %s18, 4
      %s25 = sphi 0, %s37
      %s26 = sphi 0, %s33
      %s27 = sphi 0, %s25
      %s28 = sphi 0, %s26
      %s29 = sphi 0, %s27
      %s30 = sphi 0, %s28
      %s42 = sphi 0, %s44
      %s45 = sphi 0, %s42
      %s46 = sphi 0, %s45
      %s62 = sphi 0, %s46
      %s70 = sphi 0, %s72
      %s73 = sphi 0, %s70
      %s74 = sphi 0, %s73
      %s90 = sphi 0, %s74
    $region4: #{tpu_custom_call.1} parent=1 // loop_header_branch
      %21 = sbr.rel (%p19) target = $region8
    $region5: #{tpu_custom_call.1} parent=1 // loop_body
      %s23 = ssub.s32 %s18, 1
      %s24 = ssub.s32 %s18, 2
      %s31 = sadd.s32 1, %s26
      %p32 = scmp.ge.s32.totalorder %s31, 1
      %s33 = scalar_select %p32, 0, %s31
      %s34 = sadd.s32 1, %s25
      %s35 = scalar_select %p32, %s34, %s25
      %p36 = scmp.ge.s32.totalorder %s35, 2
      %s37 = scalar_select %p36, 0, %s35
      %s38 = ssub.s32 %s25, %s37
      %s39 = ssub.s32 %s26, %s33
      %s40 = sor.u32 %s38, %s39
      %p41 = scmp.eq.s32.totalorder %s40, 0
      %s43 = sadd.s32 %s42, 1
      %s44 = scalar_select %p41, %s42, %s43
      %p47 = pneg %p41
      %p48 = scmp.eq.s32.totalorder %s18, 1
      %p49 = por %p47, %p48
      %p50 = scmp.ne.s32.totalorder %s42, %s45
      %p51 = scmp.eq.s32.totalorder %s18, 0
      %p52 = por %p50, %p51
      %p53 = scmp.ne.s32.totalorder %s42, %s45
      %p54 = scmp.eq.s32.totalorder %s23, 1
      %p55 = por %p53, %p54
      %p56 = scmp.ne.s32.totalorder %s45, %s46
      %p57 = scmp.eq.s32.totalorder %s23, 0
      %p58 = por %p56, %p57
      %p59 = scmp.ne.s32.totalorder %s45, %s46
      %p60 = scmp.eq.s32.totalorder %s24, 1
      %p61 = por %p59, %p60
      %p63 = scmp.ne.s32.totalorder %s46, %s62
      %p64 = scmp.eq.s32.totalorder %s24, 0
      %p65 = por %p63, %p64
      %s66 = ssub.s32 %s25, %s37
      %s67 = ssub.s32 %s26, %s33
      %s68 = sor.u32 %s66, %s67
      %p69 = scmp.eq.s32.totalorder %s68, 0
      %s71 = sadd.s32 %s70, 1
      %s72 = scalar_select %p69, %s70, %s71
      %p75 = pneg %p69
      %p76 = scmp.eq.s32.totalorder %s18, 1
      %p77 = por %p75, %p76
      %p78 = scmp.ne.s32.totalorder %s70, %s73
      %p79 = scmp.eq.s32.totalorder %s18, 0
      %p80 = por %p78, %p79
      %p81 = scmp.ne.s32.totalorder %s70, %s73
      %p82 = scmp.eq.s32.totalorder %s23, 1
      %p83 = por %p81, %p82
      %p84 = scmp.ne.s32.totalorder %s73, %s74
      %p85 = scmp.eq.s32.totalorder %s23, 0
      %p86 = por %p84, %p85
      %p87 = scmp.ne.s32.totalorder %s73, %s74
      %p88 = scmp.eq.s32.totalorder %s24, 1
      %p89 = por %p87, %p88
      %p91 = scmp.ne.s32.totalorder %s74, %s90
      %p92 = scmp.eq.s32.totalorder %s24, 0
      %p93 = por %p91, %p92
      %p94 = scmp.le.s32.totalorder 1, %s18
      %p95 = scmp.lt.s32.totalorder %s18, 3
      %p96 = pnand %p94, %p95
      %p97 = pneg %p96
      // Predicated region
      $region9: #{tpu_custom_call.1} parent=5 // pred_check
        _
      $region10: #{tpu_custom_call.1} parent=5 // pred_check_branch
        %99 = sbr.rel (%p96) target = $region12
      $region11: #{tpu_custom_call.1} parent=5 // pred_region
        %s100 = ssub.s32 %s18, 1
      $region12: #{tpu_custom_call.1} parent=5 // pred_fallthru
        _
      %p101 = scmp.lt.s32.totalorder %s18, 2
      // Predicated region
      $region13: #{tpu_custom_call.1} parent=5 // pred_check
        %p102 = pneg %p101
      $region14: #{tpu_custom_call.1} parent=5 // pred_check_branch
        %104 = sbr.rel (%p102) target = $region16
      $region15: #{tpu_custom_call.1} parent=5 // pred_region
        // Predicated region
        $region17: #{tpu_custom_call.1} parent=15 // pred_check
          %p105 = pneg %p52
        $region18: #{tpu_custom_call.1} parent=15 // pred_check_branch
          %107 = sbr.rel (%p105) target = $region20
        $region19: #{tpu_custom_call.1} parent=15 // pred_region
          %s108 = sand.u32 %s42, 1
          %s109 = scalar_lea.sflag [#allocation5], %s108
          %s110 = sand.u32 %s42, 1
          %s111 = smul.addr %s110, 64
          %s112 = scalar_lea.vmem [#allocation4], %s111
          %s114 = ssub.s32 1024, 1024
          %115 = vsyncadd %s109, %s114
          %s116 = smul.addr %s25, 8
          %s117 = sadd.s32 %s26, %s116
          %s118 = smul.addr %s117, 128
          %s119 = scalar_lea.hbm %s1, %s118
          %s120 = sshll.u32 %s112, 4
          %s121 = int_to_ptr.vmem [resolvable:$true] %s120
          %126 = dma.hbm_to_vmem [thread:$0]  %s119, 1024, %s121, %s109, 128, 128, 8
        $region20: #{tpu_custom_call.1} parent=15 // pred_fallthru
          _
      $region16: #{tpu_custom_call.1} parent=5 // pred_fallthru
        _
      %p127 = scmp.le.s32.totalorder 1, %s18
      %p128 = scmp.lt.s32.totalorder %s18, 3
      %p129 = pnand %p127, %p128
      %p130 = pneg %p129
      // Predicated region
      $region21: #{tpu_custom_call.1} parent=5 // pred_check
        _
      $region22: #{tpu_custom_call.1} parent=5 // pred_check_branch
        %132 = sbr.rel (%p129) target = $region24
      $region23: #{tpu_custom_call.1} parent=5 // pred_region
        %s133 = ssub.s32 %s18, 1
        %s134 = sand.u32 %s45, 1
        %s135 = scalar_lea.sflag [#allocation5], %s134
        %s136 = sand.u32 %s45, 1
        %s137 = smul.addr %s136, 64
        %s138 = scalar_lea.vmem [#allocation4], %s137
        // Predicated region
        $region25: #{tpu_custom_call.1} parent=23 // pred_check
          %p139 = pneg %p58
        $region26: #{tpu_custom_call.1} parent=23 // pred_check_branch
          %141 = sbr.rel (%p139) target = $region28
        $region27: #{tpu_custom_call.1} parent=23 // pred_region
          %142 = dma.done %s135, 1024
        $region28: #{tpu_custom_call.1} parent=23 // pred_fallthru
          _
        %s143 = sand.u32 %s45, 1
        %s144 = scalar_lea.sflag [#allocation5], %s143
        %s145 = sand.u32 %s45, 1
        %s146 = smul.addr %s145, 64
        %s147 = scalar_lea.vmem [#allocation4], %s146
        %p148 = pneg %p58
        %p149 = pneg %p55
        %p150 = pneg %p86
        %p151 = pneg %p83
        %s152 = sand.u32 %s73, 1
        %s153 = scalar_lea.sflag [#allocation6], %s152
        %s154 = sand.u32 %s73, 1
        %s155 = smul.addr %s154, 64
        %s156 = scalar_lea.vmem [#allocation7], %s155
        %v157 = vld [vmem:[%s138] sm:$0xff]
        %v158 = vld [vmem:[%s138 + $0x8] sm:$0xff]
        %v159 = vld [vmem:[%s138 + $0x10] sm:$0xff]
        %v160 = vld [vmem:[%s138 + $0x18] sm:$0xff]
        %v161 = vld [vmem:[%s138 + $0x20] sm:$0xff]
        %v162 = vld [vmem:[%s138 + $0x28] sm:$0xff]
        %v163 = vld [vmem:[%s138 + $0x30] sm:$0xff]
        %v164 = vld [vmem:[%s138 + $0x38] sm:$0xff]
        %s165 = smul.u32 %s28, 16
        %v166 = vlaneseq
        %v167 = vshrl.u32 %v166, 7
        %v168 = vadd.s32 %v167, 8
        %v169 = vlaneseq
        %v170 = vand.u32 %v169, 127
        %v171 = vstv %s165
        %v172 = vadd.s32 %v170, %v171
        %s173 = smul.u32 %s27, 8
        %s174 = sld [smem:[#allocation3 + %s173]]
        %s175 = sadd.s32 %s173, 1
        %s176 = sld [smem:[#allocation3 + %s175]]
        %v177 = vstv %s174
        %vm178 = vcmp.ge.s32.totalorder %v167, %v177
        %vm179 = vcmp.ge.s32.totalorder %v168, %v177
        %s180 = sadd.s32 %s174, %s176
        %v181 = vstv %s180
        %vm182 = vcmp.lt.s32.totalorder %v167, %v181
        %vm183 = vcmp.lt.s32.totalorder %v168, %v181
        %vm184 = vmand %vm178, %vm182
        %vm185 = vmand %vm179, %vm183
        %vm186 = vmxor %vm184, 1
        %vm187 = vmxor %vm185, 1
        %s188 = sadd.s32 %s173, 2
        %s189 = sld [smem:[#allocation3 + %s188]]
        %s190 = sadd.s32 %s173, 3
        %s191 = sld [smem:[#allocation3 + %s190]]
        %v192 = vstv %s189
        %vm193 = vcmp.ge.s32.totalorder %v167, %v192
        %vm194 = vcmp.ge.s32.totalorder %v168, %v192
        %s195 = sadd.s32 %s189, %s191
        %v196 = vstv %s195
        %vm197 = vcmp.lt.s32.totalorder %v167, %v196
        %vm198 = vcmp.lt.s32.totalorder %v168, %v196
        %vm199 = vmand %vm193, %vm197
        %vm200 = vmand %vm194, %vm198
        %vm201 = vmxor %vm199, 1
        %vm202 = vmxor %vm200, 1
        %vm203 = vmand %vm186, %vm201
        %vm204 = vmand %vm187, %vm202
        %s205 = sadd.s32 %s173, 4
        %s206 = sld [smem:[#allocation3 + %s205]]
        %s207 = sadd.s32 %s173, 5
        %s208 = sld [smem:[#allocation3 + %s207]]
        %v209 = vstv %s206
        %vm210 = vcmp.ge.s32.totalorder %v172, %v209
        %s211 = sadd.s32 %s206, %s208
        %v212 = vstv %s211
        %vm213 = vcmp.lt.s32.totalorder %v172, %v212
        %vm214 = vmand %vm210, %vm213
        %vm215 = vmxor %vm214, 1
        %s216 = sadd.s32 %s173, 6
        %s217 = sld [smem:[#allocation3 + %s216]]
        %s218 = sadd.s32 %s173, 7
        %s219 = sld [smem:[#allocation3 + %s218]]
        %v220 = vstv %s217
        %vm221 = vcmp.ge.s32.totalorder %v172, %v220
        %s222 = sadd.s32 %s217, %s219
        %v223 = vstv %s222
        %vm224 = vcmp.lt.s32.totalorder %v172, %v223
        %vm225 = vmand %vm221, %vm224
        %vm226 = vmxor %vm225, 1
        %vm227 = vmand %vm215, %vm226
        %v228 = vsel %vm203, 1, 0
        %v229 = vsel %vm204, 1, 0
        %v230 = vcvt.s32.f32 %v228
        %v231 = vcvt.s32.f32 %v229
        %v232 = vsel %vm227, 1, 0
        %v233 = vcvt.s32.f32 %v232
        %v234 = vmul.f32 %v230, %v233
        %v235 = vmul.f32 %v231, %v233
        %v236 = vmul.f32 %v157, %v234
        %v237 = vmul.f32 %v158, %v235
        %v238 = vmul.f32 %v159, %v234
        %v239 = vmul.f32 %v160, %v235
        %v240 = vmul.f32 %v161, %v234
        %v241 = vmul.f32 %v162, %v235
        %v242 = vmul.f32 %v163, %v234
        %v243 = vmul.f32 %v164, %v235
        %vm244 = vcmask 130048
        %245 = vst.msk [vmem:[%s156] sm:$0xff] %vm244, %v236
        %246 = vst.msk [vmem:[%s156 + $0x8] sm:$0xff] %vm244, %v237
        %247 = vst.msk [vmem:[%s156 + $0x10] sm:$0xff] %vm244, %v238
        %248 = vst.msk [vmem:[%s156 + $0x18] sm:$0xff] %vm244, %v239
        %249 = vst.msk [vmem:[%s156 + $0x20] sm:$0xff] %vm244, %v240
        %250 = vst.msk [vmem:[%s156 + $0x28] sm:$0xff] %vm244, %v241
        %251 = vst.msk [vmem:[%s156 + $0x30] sm:$0xff] %vm244, %v242
        %252 = vst.msk [vmem:[%s156 + $0x38] sm:$0xff] %vm244, %v243
        %s253 = sand.u32 %s73, 1
        %s254 = scalar_lea.sflag [#allocation6], %s253
        %s255 = sand.u32 %s73, 1
        %s256 = smul.addr %s255, 64
        %s257 = scalar_lea.vmem [#allocation7], %s256
        // Predicated region
        $region29: #{tpu_custom_call.1} parent=23 // pred_check
          %p258 = pneg %p83
        $region30: #{tpu_custom_call.1} parent=23 // pred_check_branch
          %260 = sbr.rel (%p258) target = $region32
        $region31: #{tpu_custom_call.1} parent=23 // pred_region
          %s262 = ssub.s32 1024, 1024
          %263 = vsyncadd %s254, %s262
          %s264 = smul.addr %s27, 8
          %s265 = sadd.s32 %s28, %s264
          %s266 = smul.addr %s265, 128
          %s267 = scalar_lea.hbm %s2, %s266
          %s268 = sshll.u32 %s257, 4
          %s269 = int_to_ptr.vmem [resolvable:$true] %s268
          %274 = dma.vmem_to_hbm [thread:$0]  %s269, 1024, %s267, %s254, 128, 128, 8
        $region32: #{tpu_custom_call.1} parent=23 // pred_fallthru
          _
      $region24: #{tpu_custom_call.1} parent=5 // pred_fallthru
        _
      %p275 = scmp.le.s32.totalorder 2, %s18
      // Predicated region
      $region33: #{tpu_custom_call.1} parent=5 // pred_check
        %p276 = pneg %p275
      $region34: #{tpu_custom_call.1} parent=5 // pred_check_branch
        %278 = sbr.rel (%p276) target = $region36
      $region35: #{tpu_custom_call.1} parent=5 // pred_region
        %s279 = ssub.s32 %s18, 2
        // Predicated region
        $region37: #{tpu_custom_call.1} parent=35 // pred_check
          %p280 = pneg %p89
        $region38: #{tpu_custom_call.1} parent=35 // pred_check_branch
          %282 = sbr.rel (%p280) target = $region40
        $region39: #{tpu_custom_call.1} parent=35 // pred_region
          %s283 = sand.u32 %s74, 1
          %s284 = scalar_lea.sflag [#allocation6], %s283
          %s285 = sand.u32 %s74, 1
          %s286 = smul.addr %s285, 64
          %s287 = scalar_lea.vmem [#allocation7], %s286
          %288 = dma.done %s284, 1024
        $region40: #{tpu_custom_call.1} parent=35 // pred_fallthru
          _
      $region36: #{tpu_custom_call.1} parent=5 // pred_fallthru
        _
    $region6: #{tpu_custom_call.1} parent=1 // loop_footer
      %s22 = sadd.s32 1, %s18
    $region7: #{tpu_custom_call.1} parent=1 // loop_footer_branch
      %17 = sbr.rel target = $region3
    $region8: #{tpu_custom_call.1} parent=1 // loop_exit
      _
    %289 = vsyncpa [#allocation5], 1
    %s290 = scalar_lea.sflag [#allocation5], 1
    %291 = vsyncpa %s290, 1
    %292 = vsyncpa [#allocation6], 1
    %s293 = scalar_lea.sflag [#allocation6], 1
    %294 = vsyncpa %s293, 1

</llo_original>
